<compile_context>
chip_gen: v7x
topology: tpu7x:2x2x1
jax: 0.10.0
libtpu: 0.0.40
codegen_flags: <defaults>
</compile_context>

<pallas_src>
import functools
import math

import numpy as np
import jax
import jax.numpy as jnp
from jax import lax
from jax.experimental import pallas as pl
from jax.experimental.pallas import tpu as pltpu


# ----------------------------------------------------------------------------
# Filter-transformation index tables (GrouPy `make_*_indices` equivalents).
# inds[t_out, s_in, u, v] = (s_in', u', v'): where the filter value for output
# orientation t_out at (s_in, u, v) is sampled from in the raw weight tensor.
# ----------------------------------------------------------------------------
def _rot_inv(u, v, r):
    # apply R_{-90 deg} r times: (u, v) -> (v, -u)
    for _ in range(r % 4):
        u, v = v, -u
    return u, v


def make_c4_z2_indices(ksize):
    assert ksize % 2 == 1, "even kernel sizes (half-shift) not supported"
    c = ksize // 2
    inds = np.zeros((4, 1, ksize, ksize, 3), dtype=np.int32)
    for r in range(4):
        for iu in range(ksize):
            for iv in range(ksize):
                up, vp = _rot_inv(iu - c, iv - c, r)
                inds[r, 0, iu, iv] = (0, up + c, vp + c)
    return inds


def make_c4_p4_indices(ksize):
    assert ksize % 2 == 1, "even kernel sizes (half-shift) not supported"
    c = ksize // 2
    inds = np.zeros((4, 4, ksize, ksize, 3), dtype=np.int32)
    for r in range(4):
        for s in range(4):
            for iu in range(ksize):
                for iv in range(ksize):
                    up, vp = _rot_inv(iu - c, iv - c, r)
                    inds[r, s, iu, iv] = ((s - r) % 4, up + c, vp + c)
    return inds

# TODO(synk): make_d4_z2_indices / make_d4_p4m_indices (D4 roto-reflection tables)
#             are not reimplemented here; only C4 output groups are supported.


def _round_up(x, m):
    return (x + m - 1) // m * m


# ----------------------------------------------------------------------------
# Pallas kernel: im2col (sublane-stacked lane-shifted taps) + one MXU matmul
# ----------------------------------------------------------------------------
def _gconv_kernel(x_ref, w_ref, b_ref, o_ref, xcol_ref, *, KH, KW, WP, CINP, NOUT):
    """
    One batch image per grid step (channels on sublanes, flat spatial on lanes).

    x_ref   : (CINP, MFLAT)       bf16  zero-padded image, row-major flattened spatial
    w_ref   : (O, KH*KW*CINP)     bf16  orientation-pooled transformed filters
    b_ref   : (O, 1)              f32   pooled bias (nto * bias)
    o_ref   : (O, NOUT)           f32   NOUT = OH*WP (wrap columns cropped in the wrapper)
    xcol_ref: (KH*KW*CINP, NOUT)  bf16  im2col scratch
    """
    # Build im2col: tap (kh, kw) is a lane-shifted view of the image; stack on sublanes.
    # CINP is a multiple of 16 so every destination sublane offset is bf16-tile aligned.
    for kh in range(KH):
        for kw in range(KW):
            tap = kh * KW + kw
            xcol_ref[pl.ds(tap * CINP, CINP), :] = x_ref[:, pl.ds(kh * WP + kw, NOUT)]

    # Single MXU pass: (O, K) @ (K, NOUT), K = KH*KW*CINP, f32 accumulation, + pooled bias.
    o_ref[...] = (
        jnp.dot(w_ref[...], xcol_ref[...], preferred_element_type=jnp.float32)
        + b_ref[...]
    )


# ----------------------------------------------------------------------------
# Module equivalent
# ----------------------------------------------------------------------------
class SplitGConv2dPallas:
    def __init__(self, g_input, g_output, in_channels, out_channels,
                 kernel_size=3, stride=1, padding=0, bias=True, *, key):
        self.ksize = kernel_size
        self.g_input, self.g_output = g_input, g_output
        if g_input == 'Z2' and g_output == 'C4':
            self.nti, self.nto = 1, 4
            self.inds = make_c4_z2_indices(kernel_size)
        elif g_input == 'C4' and g_output == 'C4':
            self.nti, self.nto = 4, 4
            self.inds = make_c4_p4_indices(kernel_size)
        else:
            raise ValueError(f'unsupported (g_input, g_output): {(g_input, g_output)}')
        self.in_channels = in_channels // self.nti
        self.out_channels = out_channels
        assert stride == 1  # TODO(synk): stride > 1 not implemented in the Pallas path
        self.stride = stride
        self.padding = padding

        # Deterministic synthetic init (mirrors xavier_normal_ weight + uniform bias).
        kw_key, kb_key = jax.random.split(key)
        wshape = (out_channels, self.in_channels, self.nti, kernel_size, kernel_size)
        fan_in = self.in_channels * self.nti * kernel_size * kernel_size
        fan_out = out_channels * self.nti * kernel_size * kernel_size
        std = math.sqrt(2.0 / (fan_in + fan_out))
        self.weight = std * jax.random.normal(kw_key, wshape, jnp.float32)
        if bias:
            stdv = 1.0 / math.sqrt(self.in_channels * kernel_size * kernel_size)
            self.bias = jax.random.uniform(kb_key, (self.out_channels,),
                                           jnp.float32, -stdv, stdv)
        else:
            self.bias = None

    # exact mirror of transform_filter_2d_nncchw + view(tw_shape)
    def _transformed_weight(self):
        O, I, nti, nto, k = (self.out_channels, self.in_channels,
                             self.nti, self.nto, self.ksize)
        inds_r = self.inds.reshape(-1, 3).astype(np.int32)
        w_indexed = self.weight[:, :, inds_r[:, 0], inds_r[:, 1], inds_r[:, 2]]
        w_indexed = w_indexed.reshape(O, I, nto, nti, k, k)
        w_t = jnp.transpose(w_indexed, (0, 1, 3, 2, 4, 5))          # permute + contiguous
        return w_t.reshape(O * nto, I * nti, k, k)                  # .view(tw_shape)

    def __call__(self, x):
        O, I, nti, nto, k = (self.out_channels, self.in_channels,
                             self.nti, self.nto, self.ksize)
        Cin = I * nti
        KK = k * k
        B = x.shape[0]
        x = x.reshape(B, Cin, x.shape[-2], x.shape[-1])
        H, W = x.shape[-2], x.shape[-1]
        ph = pw = self.padding
        Hp, Wp = H + 2 * ph, W + 2 * pw
        OH, OW = Hp - k + 1, Wp - k + 1
        NOUT = OH * Wp                       # includes Wp-OW wrap columns (cropped below)
        CinP = _round_up(Cin, 16)            # bf16 (16,128) sublane-tile alignment for im2col
        Mflat = (Hp + 1) * Wp                # one extra zero row = k-1 flat-wrap slack

        # --- filters: group-transform, fold orientation pooling + bias, cast bf16 ---
        tw = self._transformed_weight()                        # (O*nto, Cin, k, k)
        w_pool = tw.reshape(O, nto, Cin, k, k).sum(axis=1)     # fold sum over nto orientations
        w_pool = jnp.transpose(w_pool, (0, 2, 3, 1))           # (O, kh, kw, Cin) tap-major
        w_pool = jnp.pad(w_pool, ((0, 0), (0, 0), (0, 0), (0, CinP - Cin)))
        w_mat = w_pool.reshape(O, KK * CinP).astype(jnp.bfloat16)

        bias = self.bias if self.bias is not None else jnp.zeros((O,), jnp.float32)
        b_pool = (nto * bias).astype(jnp.float32).reshape(O, 1)   # bias summed over orientations

        # --- input: NCHW -> (B, CinP, (Hp+1)*Wp) bf16; no NHWC transpose needed ---
        xb = jnp.pad(x.astype(jnp.bfloat16),
                     ((0, 0), (0, CinP - Cin), (ph, ph + 1), (pw, pw)))
        x_flat = xb.reshape(B, CinP, Mflat)

        kernel = functools.partial(_gconv_kernel, KH=k, KW=k, WP=Wp,
                                   CINP=CinP, NOUT=NOUT)
        # TODO(synk): for large images / channel counts on v7x (64 MiB VMEM), add a spatial
        #             row-tile grid axis with halo handling (manual DMA) instead of one whole
        #             image per grid step; unnecessary at these sizes.
        out_flat = pl.pallas_call(
            kernel,
            out_shape=jax.ShapeDtypeStruct((B, O, NOUT), jnp.float32),
            grid=(B,),
            in_specs=[
                pl.BlockSpec((None, CinP, Mflat), lambda b: (b, 0, 0)),
                pl.BlockSpec((O, KK * CinP), lambda b: (0, 0)),
                pl.BlockSpec((O, 1), lambda b: (0, 0)),
            ],
            out_specs=pl.BlockSpec((None, O, NOUT), lambda b: (b, 0, 0)),
            scratch_shapes=[pltpu.VMEM((KK * CinP, NOUT), jnp.bfloat16)],
            compiler_params=pltpu.CompilerParams(
                dimension_semantics=("parallel",)),
        )(x_flat, w_mat, b_pool)

        # (B, O, OH*Wp) -> (B, O, OH, Wp) -> crop wrap columns -> already NCHW, no transpose.
        return out_flat.reshape(B, O, OH, Wp)[:, :, :, :OW]

    # pure-JAX reference (mirrors the PyTorch forward, in f32) for verification
    def reference_forward(self, x):
        O, I, nti, nto, k = (self.out_channels, self.in_channels,
                             self.nti, self.nto, self.ksize)
        tw = self._transformed_weight()
        B = x.shape[0]
        x = x.reshape(B, I * nti, x.shape[-2], x.shape[-1])
        p = self.padding
        y = lax.conv_general_dilated(
            x, tw, window_strides=(self.stride, self.stride),
            padding=[(p, p), (p, p)],
            dimension_numbers=('NCHW', 'OIHW', 'NCHW'))
        _, _, ny, nx = y.shape
        y = y.reshape(B, O, nto, ny, nx)
        if self.bias is not None:
            y = y + self.bias.reshape(1, O, 1, 1, 1)
        return y.sum(axis=2)                 # pool over output orientations -> (B, O, ny, nx)


if __name__ == "__main__":
    key = jax.random.PRNGKey(0)
    k1, k2, k3, kx1, kx2, kx3 = jax.random.split(key, 6)
    B, H, W = 2, 16, 16

    # Layer 1: Z2 -> C4, in=4, out=8, 3x3, stride 1, pad 0, bias.
    layer1 = SplitGConv2dPallas('Z2', 'C4', in_channels=4, out_channels=8,
                                kernel_size=3, stride=1, padding=0, bias=True, key=k1)
    x1 = jax.random.normal(kx1, (B, 4, H, W), jnp.float32)
    out1 = jax.block_until_ready(jax.jit(layer1.__call__)(x1))
    ref1 = jax.block_until_ready(layer1.reference_forward(x1))
    assert out1.shape == (B, 8, 14, 14)
    np.testing.assert_allclose(np.asarray(out1), np.asarray(ref1), rtol=2e-2, atol=5e-2)

    # Layer 2: C4 -> C4, in=16 (=4 groups x 4 orientations), out=8, pad 0.
    layer2 = SplitGConv2dPallas('C4', 'C4', in_channels=16, out_channels=8,
                                kernel_size=3, stride=1, padding=0, bias=True, key=k2)
    x2 = jax.random.normal(kx2, (B, 16, H, W), jnp.float32)
    out2 = jax.block_until_ready(jax.jit(layer2.__call__)(x2))
    ref2 = jax.block_until_ready(layer2.reference_forward(x2))
    assert out2.shape == (B, 8, 14, 14)
    np.testing.assert_allclose(np.asarray(out2), np.asarray(ref2), rtol=2e-2, atol=5e-2)

    # Layer 3: Z2 -> C4 with padding=1 (exercises the spatial-pad path), output 16x16.
    layer3 = SplitGConv2dPallas('Z2', 'C4', in_channels=4, out_channels=8,
                                kernel_size=3, stride=1, padding=1, bias=True, key=k3)
    x3 = jax.random.normal(kx3, (B, 4, H, W), jnp.float32)
    out3 = jax.block_until_ready(jax.jit(layer3.__call__)(x3))
    ref3 = jax.block_until_ready(layer3.reference_forward(x3))
    assert out3.shape == (B, 8, 16, 16)
    np.testing.assert_allclose(np.asarray(out3), np.asarray(ref3), rtol=2e-2, atol=5e-2)

    print("KERNEL_OK")
</pallas_src>

<mosaic_0001>
module attributes {stable_mosaic.version = 11 : i64} {
  func.func @_gconv_kernel(%arg0: i32, %arg1: memref<1x16x272xbf16, #tpu.memory_space<vmem>>, %arg2: memref<8x144xbf16, #tpu.memory_space<vmem>>, %arg3: memref<8x1xf32, #tpu.memory_space<vmem>>, %arg4: memref<1x8x224xf32, #tpu.memory_space<vmem>>, %arg5: memref<144x224xbf16, #tpu.memory_space<vmem>>) attributes {dimension_semantics = [#tpu.dimension_semantics<parallel>], iteration_bounds = array<i64: 2>, scalar_prefetch = 0 : i64, scratch_operands = 1 : i64, tpu.core_type = #tpu.core_type<tc>, window_params = [{transform_indices = @transform_0, window_bounds = array<i64: 1, 16, 272>}, {pipeline_mode = #tpu.pipeline_mode<synchronous>, transform_indices = @transform_1, window_bounds = array<i64: 8, 144>}, {pipeline_mode = #tpu.pipeline_mode<synchronous>, transform_indices = @transform_2, window_bounds = array<i64: 8, 1>}, {transform_indices = @transform_3, window_bounds = array<i64: 1, 8, 224>}]} {
    %c0 = arith.constant 0 : index
    %c0_0 = arith.constant 0 : index
    %c0_1 = arith.constant 0 : index
    %0 = vector.load %arg1[%c0, %c0_0, %c0_1] : memref<1x16x272xbf16, #tpu.memory_space<vmem>>, vector<1x16x224xbf16>
    %1 = vector.shape_cast %0 : vector<1x16x224xbf16> to vector<16x224xbf16>
    %c0_2 = arith.constant 0 : index
    %c0_3 = arith.constant 0 : index
    %2 = vector.load %arg5[%c0_2, %c0_3] : memref<144x224xbf16, #tpu.memory_space<vmem>>, vector<16x224xbf16>
    tpu.vector_store %arg5[%c0_2, %c0_3], %1 {strides = array<i32>} : memref<144x224xbf16, #tpu.memory_space<vmem>>, vector<16x224xbf16>,
    %c0_4 = arith.constant 0 : index
    %c0_5 = arith.constant 0 : index
    %c1 = arith.constant 1 : index
    %3 = vector.load %arg1[%c0_4, %c0_5, %c1] : memref<1x16x272xbf16, #tpu.memory_space<vmem>>, vector<1x16x224xbf16>
    %4 = vector.shape_cast %3 : vector<1x16x224xbf16> to vector<16x224xbf16>
    %c16 = arith.constant 16 : index
    %c0_6 = arith.constant 0 : index
    %5 = vector.load %arg5[%c16, %c0_6] : memref<144x224xbf16, #tpu.memory_space<vmem>>, vector<16x224xbf16>
    tpu.vector_store %arg5[%c16, %c0_6], %4 {strides = array<i32>} : memref<144x224xbf16, #tpu.memory_space<vmem>>, vector<16x224xbf16>,
    %c0_7 = arith.constant 0 : index
    %c0_8 = arith.constant 0 : index
    %c2 = arith.constant 2 : index
    %6 = vector.load %arg1[%c0_7, %c0_8, %c2] : memref<1x16x272xbf16, #tpu.memory_space<vmem>>, vector<1x16x224xbf16>
    %7 = vector.shape_cast %6 : vector<1x16x224xbf16> to vector<16x224xbf16>
    %c32 = arith.constant 32 : index
    %c0_9 = arith.constant 0 : index
    %8 = vector.load %arg5[%c32, %c0_9] : memref<144x224xbf16, #tpu.memory_space<vmem>>, vector<16x224xbf16>
    tpu.vector_store %arg5[%c32, %c0_9], %7 {strides = array<i32>} : memref<144x224xbf16, #tpu.memory_space<vmem>>, vector<16x224xbf16>,
    %c0_10 = arith.constant 0 : index
    %c0_11 = arith.constant 0 : index
    %c16_12 = arith.constant 16 : index
    %9 = vector.load %arg1[%c0_10, %c0_11, %c16_12] : memref<1x16x272xbf16, #tpu.memory_space<vmem>>, vector<1x16x224xbf16>
    %10 = vector.shape_cast %9 : vector<1x16x224xbf16> to vector<16x224xbf16>
    %c48 = arith.constant 48 : index
    %c0_13 = arith.constant 0 : index
    %11 = vector.load %arg5[%c48, %c0_13] : memref<144x224xbf16, #tpu.memory_space<vmem>>, vector<16x224xbf16>
    tpu.vector_store %arg5[%c48, %c0_13], %10 {strides = array<i32>} : memref<144x224xbf16, #tpu.memory_space<vmem>>, vector<16x224xbf16>,
    %c0_14 = arith.constant 0 : index
    %c0_15 = arith.constant 0 : index
    %c17 = arith.constant 17 : index
    %12 = vector.load %arg1[%c0_14, %c0_15, %c17] : memref<1x16x272xbf16, #tpu.memory_space<vmem>>, vector<1x16x224xbf16>
    %13 = vector.shape_cast %12 : vector<1x16x224xbf16> to vector<16x224xbf16>
    %c64 = arith.constant 64 : index
    %c0_16 = arith.constant 0 : index
    %14 = vector.load %arg5[%c64, %c0_16] : memref<144x224xbf16, #tpu.memory_space<vmem>>, vector<16x224xbf16>
    tpu.vector_store %arg5[%c64, %c0_16], %13 {strides = array<i32>} : memref<144x224xbf16, #tpu.memory_space<vmem>>, vector<16x224xbf16>,
    %c0_17 = arith.constant 0 : index
    %c0_18 = arith.constant 0 : index
    %c18 = arith.constant 18 : index
    %15 = vector.load %arg1[%c0_17, %c0_18, %c18] : memref<1x16x272xbf16, #tpu.memory_space<vmem>>, vector<1x16x224xbf16>
    %16 = vector.shape_cast %15 : vector<1x16x224xbf16> to vector<16x224xbf16>
    %c80 = arith.constant 80 : index
    %c0_19 = arith.constant 0 : index
    %17 = vector.load %arg5[%c80, %c0_19] : memref<144x224xbf16, #tpu.memory_space<vmem>>, vector<16x224xbf16>
    tpu.vector_store %arg5[%c80, %c0_19], %16 {strides = array<i32>} : memref<144x224xbf16, #tpu.memory_space<vmem>>, vector<16x224xbf16>,
    %c0_20 = arith.constant 0 : index
    %c0_21 = arith.constant 0 : index
    %c32_22 = arith.constant 32 : index
    %18 = vector.load %arg1[%c0_20, %c0_21, %c32_22] : memref<1x16x272xbf16, #tpu.memory_space<vmem>>, vector<1x16x224xbf16>
    %19 = vector.shape_cast %18 : vector<1x16x224xbf16> to vector<16x224xbf16>
    %c96 = arith.constant 96 : index
    %c0_23 = arith.constant 0 : index
    %20 = vector.load %arg5[%c96, %c0_23] : memref<144x224xbf16, #tpu.memory_space<vmem>>, vector<16x224xbf16>
    tpu.vector_store %arg5[%c96, %c0_23], %19 {strides = array<i32>} : memref<144x224xbf16, #tpu.memory_space<vmem>>, vector<16x224xbf16>,
    %c0_24 = arith.constant 0 : index
    %c0_25 = arith.constant 0 : index
    %c33 = arith.constant 33 : index
    %21 = vector.load %arg1[%c0_24, %c0_25, %c33] : memref<1x16x272xbf16, #tpu.memory_space<vmem>>, vector<1x16x224xbf16>
    %22 = vector.shape_cast %21 : vector<1x16x224xbf16> to vector<16x224xbf16>
    %c112 = arith.constant 112 : index
    %c0_26 = arith.constant 0 : index
    %23 = vector.load %arg5[%c112, %c0_26] : memref<144x224xbf16, #tpu.memory_space<vmem>>, vector<16x224xbf16>
    tpu.vector_store %arg5[%c112, %c0_26], %22 {strides = array<i32>} : memref<144x224xbf16, #tpu.memory_space<vmem>>, vector<16x224xbf16>,
    %c0_27 = arith.constant 0 : index
    %c0_28 = arith.constant 0 : index
    %c34 = arith.constant 34 : index
    %24 = vector.load %arg1[%c0_27, %c0_28, %c34] : memref<1x16x272xbf16, #tpu.memory_space<vmem>>, vector<1x16x224xbf16>
    %25 = vector.shape_cast %24 : vector<1x16x224xbf16> to vector<16x224xbf16>
    %c128 = arith.constant 128 : index
    %c0_29 = arith.constant 0 : index
    %26 = vector.load %arg5[%c128, %c0_29] : memref<144x224xbf16, #tpu.memory_space<vmem>>, vector<16x224xbf16>
    tpu.vector_store %arg5[%c128, %c0_29], %25 {strides = array<i32>} : memref<144x224xbf16, #tpu.memory_space<vmem>>, vector<16x224xbf16>,
    %c0_30 = arith.constant 0 : index
    %c0_31 = arith.constant 0 : index
    %27 = vector.load %arg2[%c0_30, %c0_31] : memref<8x144xbf16, #tpu.memory_space<vmem>>, vector<8x144xbf16>
    %c0_32 = arith.constant 0 : index
    %c0_33 = arith.constant 0 : index
    %28 = vector.load %arg5[%c0_32, %c0_33] : memref<144x224xbf16, #tpu.memory_space<vmem>>, vector<144x224xbf16>
    %cst = arith.constant dense<0.000000e+00> : vector<8x224xf32>
    %29 = tpu.matmul %27, %28, %cst {dimension_numbers = #tpu.dot_dimension_numbers<[1], [0], [0], [1], [0, 0, 1, 1], [], []>} : vector<8x144xbf16>, vector<144x224xbf16>, vector<8x224xf32> -> vector<8x224xf32>
    %c0_34 = arith.constant 0 : index
    %c0_35 = arith.constant 0 : index
    %30 = vector.load %arg3[%c0_34, %c0_35] : memref<8x1xf32, #tpu.memory_space<vmem>>, vector<8x1xf32>
    %31 = vector.broadcast %30 : vector<8x1xf32> to vector<8x224xf32>
    %32 = arith.addf %29, %31 : vector<8x224xf32>
    %c0_36 = arith.constant 0 : index
    %c0_37 = arith.constant 0 : index
    %c0_38 = arith.constant 0 : index
    %33 = vector.load %arg4[%c0_36, %c0_37, %c0_38] : memref<1x8x224xf32, #tpu.memory_space<vmem>>, vector<1x8x224xf32>
    %34 = vector.shape_cast %33 : vector<1x8x224xf32> to vector<8x224xf32>
    %35 = vector.shape_cast %32 : vector<8x224xf32> to vector<1x8x224xf32>
    tpu.vector_store %arg4[%c0_36, %c0_37, %c0_38], %35 {strides = array<i32>} : memref<1x8x224xf32, #tpu.memory_space<vmem>>, vector<1x8x224xf32>,
    return
  }
  func.func @transform_0(%arg0: i32) -> (i32, i32, i32) {
    %c0_i32 = arith.constant 0 : i32
    %c0_i32_0 = arith.constant 0 : i32
    %c0_i32_1 = arith.constant 0 : i32
    return %arg0, %c0_i32, %c0_i32_0 : i32, i32, i32
  }
  func.func @transform_1(%arg0: i32) -> (i32, i32) {
    %c0_i32 = arith.constant 0 : i32
    %c0_i32_0 = arith.constant 0 : i32
    %c0_i32_1 = arith.constant 0 : i32
    return %c0_i32, %c0_i32_0 : i32, i32
  }
  func.func @transform_2(%arg0: i32) -> (i32, i32) {
    %c0_i32 = arith.constant 0 : i32
    %c0_i32_0 = arith.constant 0 : i32
    %c0_i32_1 = arith.constant 0 : i32
    return %c0_i32, %c0_i32_0 : i32, i32
  }
  func.func @transform_3(%arg0: i32) -> (i32, i32, i32) {
    %c0_i32 = arith.constant 0 : i32
    %c0_i32_0 = arith.constant 0 : i32
    %c0_i32_1 = arith.constant 0 : i32
    return %arg0, %c0_i32, %c0_i32_0 : i32, i32, i32
  }
}

</mosaic_0001>

<llo_original>
// kernel: a_call__.1
$region0: #{a_call__.1}
  #allocation0 [shape = 'u32[]', space=smem, size = 0x4, offset = 0x4, fixed_abs, tag = 'smem constant byte address 0x4 - core index']
  #allocation1 [shape = 'u32[144,128]{1,0:T(1,128)}', space=vmem, size = 0x12000, scoped, tag = 'internal scratch']
  #allocation2 [shape = 'bf16[144,224]{1,0:T(16,128)(2,1)}', space=vmem, size = 0x12000, scoped, tag = 'scratch operand']
  %s0 = inlined_call_operand.vmem [shape: bf16[2,16,272], index: 0, kind: input, shape index: {}]
  %s1 = inlined_call_operand.vmem [shape: bf16[8,144], index: 1, kind: input, shape index: {}]
  %s2 = inlined_call_operand.vmem [shape: f32[8,1], index: 2, kind: input, shape index: {}]
  %s3 = inlined_call_operand.vmem [shape: f32[2,8,224], index: 3, kind: output, shape index: {}]
  %s4 = sld [smem:[#allocation0]]
  $region45: #{a_call__.1} parent=0
    _
  %s6 = ssub.s32 1, %s4
  %s7 = scalar_select 0, %s6, %s4
  loop: start=0, step=1, limit=4
  $region2: #{a_call__.1} parent=0 // loop_pre_header
    _
  $region3: #{a_call__.1} parent=0 // loop_header
    %s9 = sphi 0, %s13
    %p10 = scmp.ge.s32.totalorder %s9, 4
    %s19 = sphi 0, %s21
    %s22 = sphi 0, %s19
    %s23 = sphi 0, %s22
    %s39 = sphi 0, %s23
    %s43 = sphi 0, %s43
    %s45 = sphi 0, %s43
    %s46 = sphi 0, %s45
    %s60 = sphi 0, %s46
    %s64 = sphi 0, %s64
    %s66 = sphi 0, %s64
    %s67 = sphi 0, %s66
    %s81 = sphi 0, %s67
    %s87 = sphi 0, %s89
    %s90 = sphi 0, %s87
    %s91 = sphi 0, %s90
    %s107 = sphi 0, %s91
  $region4: #{a_call__.1} parent=0 // loop_header_branch
    %12 = sbr.rel (%p10) target = $region8
  $region5: #{a_call__.1} parent=0 // loop_body
    %s14 = ssub.s32 %s9, 1
    %s15 = ssub.s32 %s9, 2
    %s16 = sadd.s32 %s9, 1
    %s17 = ssub.s32 %s9, %s16
    %p18 = scmp.eq.s32.totalorder %s17, 0
    %s20 = sadd.s32 %s19, 1
    %s21 = scalar_select %p18, %s19, %s20
    %p24 = pneg %p18
    %p25 = scmp.eq.s32.totalorder %s9, 1
    %p26 = por %p24, %p25
    %p27 = scmp.ne.s32.totalorder %s19, %s22
    %p28 = scmp.eq.s32.totalorder %s9, 0
    %p29 = por %p27, %p28
    %p30 = scmp.ne.s32.totalorder %s19, %s22
    %p31 = scmp.eq.s32.totalorder %s14, 1
    %p32 = por %p30, %p31
    %p33 = scmp.ne.s32.totalorder %s22, %s23
    %p34 = scmp.eq.s32.totalorder %s14, 0
    %p35 = por %p33, %p34
    %p36 = scmp.ne.s32.totalorder %s22, %s23
    %p37 = scmp.eq.s32.totalorder %s15, 1
    %p38 = por %p36, %p37
    %p40 = scmp.ne.s32.totalorder %s23, %s39
    %p41 = scmp.eq.s32.totalorder %s15, 0
    %p42 = por %p40, %p41
    %s44 = sadd.s32 %s43, 1
    %p47 = scmp.eq.s32.totalorder %s9, 1
    %p48 = scmp.ne.s32.totalorder %s43, %s45
    %p49 = scmp.eq.s32.totalorder %s9, 0
    %p50 = por %p48, %p49
    %p51 = scmp.ne.s32.totalorder %s43, %s45
    %p52 = scmp.eq.s32.totalorder %s14, 1
    %p53 = por %p51, %p52
    %p54 = scmp.ne.s32.totalorder %s45, %s46
    %p55 = scmp.eq.s32.totalorder %s14, 0
    %p56 = por %p54, %p55
    %p57 = scmp.ne.s32.totalorder %s45, %s46
    %p58 = scmp.eq.s32.totalorder %s15, 1
    %p59 = por %p57, %p58
    %p61 = scmp.ne.s32.totalorder %s46, %s60
    %p62 = scmp.eq.s32.totalorder %s15, 0
    %p63 = por %p61, %p62
    %s65 = sadd.s32 %s64, 1
    %p68 = scmp.eq.s32.totalorder %s9, 1
    %p69 = scmp.ne.s32.totalorder %s64, %s66
    %p70 = scmp.eq.s32.totalorder %s9, 0
    %p71 = por %p69, %p70
    %p72 = scmp.ne.s32.totalorder %s64, %s66
    %p73 = scmp.eq.s32.totalorder %s14, 1
    %p74 = por %p72, %p73
    %p75 = scmp.ne.s32.totalorder %s66, %s67
    %p76 = scmp.eq.s32.totalorder %s14, 0
    %p77 = por %p75, %p76
    %p78 = scmp.ne.s32.totalorder %s66, %s67
    %p79 = scmp.eq.s32.totalorder %s15, 1
    %p80 = por %p78, %p79
    %p82 = scmp.ne.s32.totalorder %s67, %s81
    %p83 = scmp.eq.s32.totalorder %s15, 0
    %p84 = por %p82, %p83
    %s85 = ssub.s32 %s9, %s16
    %p86 = scmp.eq.s32.totalorder %s85, 0
    %s88 = sadd.s32 %s87, 1
    %s89 = scalar_select %p86, %s87, %s88
    %p92 = pneg %p86
    %p93 = scmp.eq.s32.totalorder %s9, 1
    %p94 = por %p92, %p93
    %p95 = scmp.ne.s32.totalorder %s87, %s90
    %p96 = scmp.eq.s32.totalorder %s9, 0
    %p97 = por %p95, %p96
    %p98 = scmp.ne.s32.totalorder %s87, %s90
    %p99 = scmp.eq.s32.totalorder %s14, 1
    %p100 = por %p98, %p99
    %p101 = scmp.ne.s32.totalorder %s90, %s91
    %p102 = scmp.eq.s32.totalorder %s14, 0
    %p103 = por %p101, %p102
    %p104 = scmp.ne.s32.totalorder %s90, %s91
    %p105 = scmp.eq.s32.totalorder %s15, 1
    %p106 = por %p104, %p105
    %p108 = scmp.ne.s32.totalorder %s91, %s107
    %p109 = scmp.eq.s32.totalorder %s15, 0
    %p110 = por %p108, %p109
    %p111 = scmp.le.s32.totalorder 1, %s9
    %p112 = scmp.lt.s32.totalorder %s9, 3
    %p113 = pnand %p111, %p112
    %p114 = pneg %p113
    // Predicated region
    $region9: #{a_call__.1} parent=5 // pred_check
      _
    $region10: #{a_call__.1} parent=5 // pred_check_branch
      %116 = sbr.rel (%p113) target = $region12
    $region11: #{a_call__.1} parent=5 // pred_region
      %s117 = ssub.s32 %s9, 1
      // Predicated region
      $region13: #{a_call__.1} parent=11 // pred_check
        %p118 = pneg %p56
      $region14: #{a_call__.1} parent=11 // pred_check_branch
        %120 = sbr.rel (%p118) target = $region16
      $region15: #{a_call__.1} parent=11 // pred_region
        _
      $region16: #{a_call__.1} parent=11 // pred_fallthru
        _
      // Predicated region
      $region17: #{a_call__.1} parent=11 // pred_check
        %p121 = pneg %p77
      $region18: #{a_call__.1} parent=11 // pred_check_branch
        %123 = sbr.rel (%p121) target = $region20
      $region19: #{a_call__.1} parent=11 // pred_region
        _
      $region20: #{a_call__.1} parent=11 // pred_fallthru
        _
    $region12: #{a_call__.1} parent=5 // pred_fallthru
      _
    %p124 = scmp.lt.s32.totalorder %s9, 2
    // Predicated region
    $region21: #{a_call__.1} parent=5 // pred_check
      %p125 = pneg %p124
    $region22: #{a_call__.1} parent=5 // pred_check_branch
      %127 = sbr.rel (%p125) target = $region24
    $region23: #{a_call__.1} parent=5 // pred_region
      // Predicated region
      $region25: #{a_call__.1} parent=23 // pred_check
        %p128 = pneg %p29
      $region26: #{a_call__.1} parent=23 // pred_check_branch
        %130 = sbr.rel (%p128) target = $region28
      $region27: #{a_call__.1} parent=23 // pred_region
        %p131 = scmp.lt.s32.totalorder %s9, 1
        %s132 = scalar_select %p131, %s9, 1
        %s133 = smul.addr %s132, 6
        %s134 = smul.addr %s133, 4
        %s135 = scalar_lea.vmem %s0, %s134
      $region28: #{a_call__.1} parent=23 // pred_fallthru
        _
    $region24: #{a_call__.1} parent=5 // pred_fallthru
      _
    %p136 = scmp.le.s32.totalorder 1, %s9
    %p137 = scmp.lt.s32.totalorder %s9, 3
    %p138 = pnand %p136, %p137
    %p139 = pneg %p138
    // Predicated region
    $region29: #{a_call__.1} parent=5 // pred_check
      _
    $region30: #{a_call__.1} parent=5 // pred_check_branch
      %141 = sbr.rel (%p138) target = $region32
    $region31: #{a_call__.1} parent=5 // pred_region
      %s142 = ssub.s32 %s9, 1
      %p143 = scmp.lt.s32.totalorder %s14, 1
      %s144 = scalar_select %p143, %s14, 1
      %s145 = smul.addr %s144, 6
      %s146 = smul.addr %s145, 4
      %s147 = scalar_lea.vmem %s0, %s146
      %p148 = pneg %p35
      %p149 = pneg %p32
      %p150 = pneg %p56
      %p151 = pneg %p53
      %p152 = pneg %p77
      %p153 = pneg %p74
      %p154 = pneg %p103
      %p155 = pneg %p100
      %p156 = scmp.lt.s32.totalorder %s14, 1
      %s157 = scalar_select %p156, %s14, 1
      %s158 = smul.addr %s157, 2
      %s159 = smul.addr %s158, 8
      %s160 = scalar_lea.vmem %s3, %s159
      %p161 = scmp.lt.s32.totalorder %s14, 1
      %s162 = scalar_select %p161, %s14, 1
      %s163 = smul.addr %s162, 6
      %s164 = smul.addr %s163, 4
      %s165 = scalar_lea.vmem %s0, %s164
      %p166 = scmp.lt.s32.totalorder %s14, 1
      %s167 = scalar_select %p166, %s14, 1
      %s168 = smul.addr %s167, 2
      %s169 = smul.addr %s168, 8
      %s170 = scalar_lea.vmem %s3, %s169
      %v172 = vld [vmem:[%s165] sm:$0xff]
      %v173 = vld [vmem:[%s165 + $0xc] sm:$0xff]
      %v176 = vunpack.c.l.b16 %v172
      %v177 = vunpack.c.h.b16 %v172
      %v178 = vunpack.c.l.b16 %v173
      %v179 = vunpack.c.h.b16 %v173
      %v180 = vpack.c.b16 %v178, %v176
      %v181 = vpack.c.b16 %v179, %v177
      %184 = vst [vmem:[#allocation2] sm:$0xff] %v180
      %vm185 = vcmask 785408
      %186 = vst.msk [vmem:[#allocation2 + $0x8] sm:$0xff] %vm185, %v181
      %v187 = vld [vmem:[%s165] sm:$0xff]
      %v188 = vld [vmem:[%s165 + $0xc] sm:$0xff]
      %v191 = vunpack.c.l.b16 %v187
      %v192 = vunpack.c.h.b16 %v187
      %v193 = vunpack.c.l.b16 %v188
      %v194 = vunpack.c.h.b16 %v188
      %v195 = vpack.c.b16 %v193, %v191
      %v196 = vpack.c.b16 %v194, %v192
      %197 = vrot.lane.b32.xlu0 %v195, 127
      %v198 = vpop.permute.xlu0 %197
      %199 = vrot.lane.b32.xlu0 %v196, 127
      %v200 = vpop.permute.xlu0 %199
      %vm201 = vcmask 1039360
      %v202 = vsel %vm201, %v198, %v200
      %205 = vst [vmem:[#allocation2 + $0x10] sm:$0xff] %v202
      %206 = vst.msk [vmem:[#allocation2 + $0x18] sm:$0xff] %vm185, %v200
      %v207 = vld [vmem:[%s165] sm:$0xff]
      %v208 = vld [vmem:[%s165 + $0xc] sm:$0xff]
      %v211 = vunpack.c.l.b16 %v207
      %v212 = vunpack.c.h.b16 %v207
      %v213 = vunpack.c.l.b16 %v208
      %v214 = vunpack.c.h.b16 %v208
      %v215 = vpack.c.b16 %v213, %v211
      %v216 = vpack.c.b16 %v214, %v212
      %217 = vrot.lane.b32.xlu0 %v215, 126
      %v218 = vpop.permute.xlu0 %217
      %219 = vrot.lane.b32.xlu0 %v216, 126
      %v220 = vpop.permute.xlu0 %219
      %vm221 = vcmask 1031168
      %v222 = vsel %vm221, %v218, %v220
      %225 = vst [vmem:[#allocation2 + $0x20] sm:$0xff] %v222
      %226 = vst.msk [vmem:[#allocation2 + $0x28] sm:$0xff] %vm185, %v220
      %v227 = vld [vmem:[%s165] sm:$0xff]
      %v228 = vld [vmem:[%s165 + $0xc] sm:$0xff]
      %v231 = vunpack.c.l.b16 %v227
      %v232 = vunpack.c.h.b16 %v227
      %v233 = vunpack.c.l.b16 %v228
      %v234 = vunpack.c.h.b16 %v228
      %v235 = vpack.c.b16 %v233, %v231
      %v236 = vpack.c.b16 %v234, %v232
      %237 = vrot.lane.b32.xlu0 %v235, 112
      %v238 = vpop.permute.xlu0 %237
      %239 = vrot.lane.b32.xlu0 %v236, 112
      %v240 = vpop.permute.xlu0 %239
      %vm241 = vcmask 916480
      %v242 = vsel %vm241, %v238, %v240
      %245 = vst [vmem:[#allocation2 + $0x30] sm:$0xff] %v242
      %246 = vst.msk [vmem:[#allocation2 + $0x38] sm:$0xff] %vm185, %v240
      %v247 = vld [vmem:[%s165] sm:$0xff]
      %v248 = vld [vmem:[%s165 + $0xc] sm:$0xff]
      %v251 = vunpack.c.l.b16 %v247
      %v252 = vunpack.c.h.b16 %v247
      %v253 = vunpack.c.l.b16 %v248
      %v254 = vunpack.c.h.b16 %v248
      %v255 = vpack.c.b16 %v253, %v251
      %v256 = vpack.c.b16 %v254, %v252
      %257 = vrot.lane.b32.xlu0 %v255, 111
      %v258 = vpop.permute.xlu0 %257
      %259 = vrot.lane.b32.xlu0 %v256, 111
      %v260 = vpop.permute.xlu0 %259
      %vm261 = vcmask 908288
      %v262 = vsel %vm261, %v258, %v260
      %265 = vst [vmem:[#allocation2 + $0x40] sm:$0xff] %v262
      %266 = vst.msk [vmem:[#allocation2 + $0x48] sm:$0xff] %vm185, %v260
      %v267 = vld [vmem:[%s165] sm:$0xff]
      %v268 = vld [vmem:[%s165 + $0xc] sm:$0xff]
      %v271 = vunpack.c.l.b16 %v267
      %v272 = vunpack.c.h.b16 %v267
      %v273 = vunpack.c.l.b16 %v268
      %v274 = vunpack.c.h.b16 %v268
      %v275 = vpack.c.b16 %v273, %v271
      %v276 = vpack.c.b16 %v274, %v272
      %277 = vrot.lane.b32.xlu0 %v275, 110
      %v278 = vpop.permute.xlu0 %277
      %279 = vrot.lane.b32.xlu0 %v276, 110
      %v280 = vpop.permute.xlu0 %279
      %vm281 = vcmask 900096
      %v282 = vsel %vm281, %v278, %v280
      %285 = vst [vmem:[#allocation2 + $0x50] sm:$0xff] %v282
      %286 = vst.msk [vmem:[#allocation2 + $0x58] sm:$0xff] %vm185, %v280
      %v287 = vld [vmem:[%s165] sm:$0xff]
      %v288 = vld [vmem:[%s165 + $0xc] sm:$0xff]
      %v291 = vunpack.c.l.b16 %v287
      %v292 = vunpack.c.h.b16 %v287
      %v293 = vunpack.c.l.b16 %v288
      %v294 = vunpack.c.h.b16 %v288
      %v295 = vpack.c.b16 %v293, %v291
      %v296 = vpack.c.b16 %v294, %v292
      %297 = vrot.lane.b32.xlu0 %v295, 96
      %v298 = vpop.permute.xlu0 %297
      %299 = vrot.lane.b32.xlu0 %v296, 96
      %v300 = vpop.permute.xlu0 %299
      %vm301 = vcmask 785408
      %v302 = vsel %vm301, %v298, %v300
      %305 = vst [vmem:[#allocation2 + $0x60] sm:$0xff] %v302
      %306 = vst.msk [vmem:[#allocation2 + $0x68] sm:$0xff] %vm185, %v300
      %v307 = vld [vmem:[%s165] sm:$0xff]
      %v308 = vld [vmem:[%s165 + $0x8] sm:$0xf]
      %v309 = vld [vmem:[%s165 + $0xc] sm:$0xff]
      %v310 = vld [vmem:[%s165 + $0x14] sm:$0xf]
      %v315 = vunpack.c.l.b16 %v307
      %v316 = vunpack.c.h.b16 %v307
      %v317 = vunpack.c.l.b16 %v308
      %v318 = vunpack.c.l.b16 %v309
      %v319 = vunpack.c.h.b16 %v309
      %v320 = vunpack.c.l.b16 %v310
      %v321 = vpack.c.b16 %v318, %v315
      %v322 = vpack.c.b16 %v319, %v316
      %v323 = vpack.c.b16 %v320, %v317
      %324 = vrot.lane.b32.xlu0 %v321, 95
      %v325 = vpop.permute.xlu0 %324
      %326 = vrot.lane.b32.xlu0 %v322, 95
      %v327 = vpop.permute.xlu0 %326
      %328 = vrot.lane.b32.xlu0 %v323, 95
      %v329 = vpop.permute.xlu0 %328
      %vm330 = vcmask 777216
      %v331 = vsel %vm330, %v325, %v327
      %v332 = vsel %vm330, %v327, %v329
      %335 = vst [vmem:[#allocation2 + $0x70] sm:$0xff] %v331
      %336 = vst.msk [vmem:[#allocation2 + $0x78] sm:$0xff] %vm185, %v332
      %v337 = vld [vmem:[%s165] sm:$0xff]
      %v338 = vld [vmem:[%s165 + $0x8] sm:$0xf]
      %v339 = vld [vmem:[%s165 + $0xc] sm:$0xff]
      %v340 = vld [vmem:[%s165 + $0x14] sm:$0xf]
      %v345 = vunpack.c.l.b16 %v337
      %v346 = vunpack.c.h.b16 %v337
      %v347 = vunpack.c.l.b16 %v338
      %v348 = vunpack.c.l.b16 %v339
      %v349 = vunpack.c.h.b16 %v339
      %v350 = vunpack.c.l.b16 %v340
      %v351 = vpack.c.b16 %v348, %v345
      %v352 = vpack.c.b16 %v349, %v346
      %v353 = vpack.c.b16 %v350, %v347
      %354 = vrot.lane.b32.xlu0 %v351, 94
      %v355 = vpop.permute.xlu0 %354
      %356 = vrot.lane.b32.xlu0 %v352, 94
      %v357 = vpop.permute.xlu0 %356
      %358 = vrot.lane.b32.xlu0 %v353, 94
      %v359 = vpop.permute.xlu0 %358
      %vm360 = vcmask 769024
      %v361 = vsel %vm360, %v355, %v357
      %v362 = vsel %vm360, %v357, %v359
      %365 = vst [vmem:[#allocation2 + $0x80] sm:$0xff] %v361
      %366 = vst.msk [vmem:[#allocation2 + $0x88] sm:$0xff] %vm185, %v362
      %v367 = vld [vmem:[%s1] sm:$0xff]
      %v368 = vld [vmem:[#allocation2] sm:$0xff]
      %v369 = vld [vmem:[#allocation2 + $0x8] sm:$0xff]
      %v370 = vld [vmem:[#allocation2 + $0x10] sm:$0xff]
      %v371 = vld [vmem:[#allocation2 + $0x18] sm:$0xff]
      %v372 = vld [vmem:[#allocation2 + $0x20] sm:$0xff]
      %v373 = vld [vmem:[#allocation2 + $0x28] sm:$0xff]
      %v374 = vld [vmem:[#allocation2 + $0x30] sm:$0xff]
      %v375 = vld [vmem:[#allocation2 + $0x38] sm:$0xff]
      %v376 = vld [vmem:[#allocation2 + $0x40] sm:$0xff]
      %v377 = vld [vmem:[#allocation2 + $0x48] sm:$0xff]
      %v378 = vld [vmem:[#allocation2 + $0x50] sm:$0xff]
      %v379 = vld [vmem:[#allocation2 + $0x58] sm:$0xff]
      %v380 = vld [vmem:[#allocation2 + $0x60] sm:$0xff]
      %v381 = vld [vmem:[#allocation2 + $0x68] sm:$0xff]
      %v382 = vld [vmem:[#allocation2 + $0x70] sm:$0xff]
      %v383 = vld [vmem:[#allocation2 + $0x78] sm:$0xff]
      %v384 = vld [vmem:[#allocation2 + $0x80] sm:$0xff]
      %v385 = vld [vmem:[#allocation2 + $0x88] sm:$0xff]
      %v386 = vld [vmem:[%s2] sm:$0xff]
      %388 = vset.pattern.permute.xlu0 0
      %389 = vperm.xlu0 %388, %v386
      %v390 = vpop.permute.xlu0 %389
      %v393 = vunpack.c.l.b16 %v367
      %v394 = vunpack.c.h.b16 %v367
      %v395 = vpack.c.b16 %v393, %v393
      %v396 = vpack.c.b16 %v394, %v394
      %vm398 = vcmask 130048
      %v400 = vsel %vm398, %v396, 0
      %402 = vmatprep.subr.bf16.mxu0 %v369
      %403 = vmatpush1.bf16.msra.mxu0 %v368
      %404 = vmatprep.subr.bf16.mxu0 %v371
      %405 = vmatpush1.bf16.msra.mxu0 %v370
      %406 = vmatprep.subr.bf16.mxu0 %v373
      %407 = vmatpush1.bf16.msra.mxu0 %v372
      %408 = vmatprep.subr.bf16.mxu0 %v375
      %409 = vmatpush1.bf16.msra.mxu0 %v374
      %410 = vmatprep.subr.bf16.mxu0 %v377
      %411 = vmatpush1.bf16.msra.mxu0 %v376
      %412 = vmatprep.subr.bf16.mxu0 %v379
      %413 = vmatpush1.bf16.msra.mxu0 %v378
      %414 = vmatprep.subr.bf16.mxu0 %v381
      %415 = vmatpush1.bf16.msra.mxu0 %v380
      %416 = vmatprep.subr.bf16.mxu0 %v383
      %417 = vmatpush1.bf16.msra.mxu0 %v382
      %418 = vmatprep.subr.bf16.mxu0 %v385
      %419 = vmatpush1.bf16.msra.mxu0 %v384
      %420 = vmatprep.subr.bf16.mxu0 0
      %421 = vmatpush1.bf16.msra.mxu0 0
      %422 = vmatprep.subr.bf16.mxu0 0
      %423 = vmatpush1.bf16.msra.mxu0 0
      %424 = vmatprep.subr.bf16.mxu0 0
      %425 = vmatpush1.bf16.msra.mxu0 0
      %426 = vmatprep.subr.bf16.mxu0 0
      %427 = vmatpush1.bf16.msra.mxu0 0
      %428 = vmatprep.subr.bf16.mxu0 0
      %429 = vmatpush1.bf16.msra.mxu0 0
      %430 = vmatprep.subr.bf16.mxu0 0
      %431 = vmatpush1.bf16.msra.mxu0 0
      %432 = vmatprep.subr.bf16.mxu0 0
      %433 = vmatpush1.bf16.msra.mxu0 0
      %434 = vmatprep.mubr.bf16.mxu0 %v400
      %435 = vmatmul.mubr.bf16.gmra.mrb[0].mxu0 %v395
      %v436 = vpop.f32.mrb[0].mxu0
      %v437 = vadd.f32 %v390, %v436
      %v438 = vpop.f32.mrb[0].mxu0
      %v439 = vadd.f32 %v390, %v438
      %v440 = vpop.f32.mrb[0].mxu0
      %v441 = vpop.f32.mrb[0].mxu0
      %442 = vdwg.mxu0
      %443 = vst [vmem:[%s170] sm:$0xff] %v437
      %444 = vst.msk [vmem:[%s170 + $0x8] sm:$0xff] %vm185, %v439
      %p445 = scmp.lt.s32.totalorder %s14, 1
      %s446 = scalar_select %p445, %s14, 1
      %s447 = smul.addr %s446, 2
      %s448 = smul.addr %s447, 8
      %s449 = scalar_lea.vmem %s3, %s448
      // Predicated region
      $region33: #{a_call__.1} parent=31 // pred_check
        %p450 = pneg %p100
      $region34: #{a_call__.1} parent=31 // pred_check_branch
        %452 = sbr.rel (%p450) target = $region36
      $region35: #{a_call__.1} parent=31 // pred_region
        _
      $region36: #{a_call__.1} parent=31 // pred_fallthru
        _
    $region32: #{a_call__.1} parent=5 // pred_fallthru
      _
    %p453 = scmp.le.s32.totalorder 2, %s9
    // Predicated region
    $region37: #{a_call__.1} parent=5 // pred_check
      %p454 = pneg %p453
    $region38: #{a_call__.1} parent=5 // pred_check_branch
      %456 = sbr.rel (%p454) target = $region40
    $region39: #{a_call__.1} parent=5 // pred_region
      %s457 = ssub.s32 %s9, 2
      // Predicated region
      $region41: #{a_call__.1} parent=39 // pred_check
        %p458 = pneg %p106
      $region42: #{a_call__.1} parent=39 // pred_check_branch
        %460 = sbr.rel (%p458) target = $region44
      $region43: #{a_call__.1} parent=39 // pred_region
        %p461 = scmp.lt.s32.totalorder %s15, 1
        %s462 = scalar_select %p461, %s15, 1
        %s463 = smul.addr %s462, 2
        %s464 = smul.addr %s463, 8
        %s465 = scalar_lea.vmem %s3, %s464
      $region44: #{a_call__.1} parent=39 // pred_fallthru
        _
    $region40: #{a_call__.1} parent=5 // pred_fallthru
      _
  $region6: #{a_call__.1} parent=0 // loop_footer
    %s13 = sadd.s32 1, %s9
  $region7: #{a_call__.1} parent=0 // loop_footer_branch
    %8 = sbr.rel target = $region3
  $region8: #{a_call__.1} parent=0 // loop_exit
    _

</llo_original>
